<compile_context>
chip_gen: v7x
topology: tpu7x:2x2x1
jax: 0.10.0
libtpu: 0.0.40
codegen_flags: <defaults>
</compile_context>

<pallas_src>
import jax
import jax.numpy as jnp
from jax.experimental import pallas as pl
from jax.experimental.pallas import tpu as pltpu

_LANES = 128


def _round_up(a, b):
    return (a + b - 1) // b * b


# ----------------------------------------------------------------------------
# Pallas kernel: per row-tile, fused  tanh(x@Wt + b) -> sigmoid(<h, cv>) -> x*w
# ----------------------------------------------------------------------------
def _attention_kernel(x_ref, wt_ref, bt_ref, cv_ref, out_ref, w_ref):
    x = x_ref[...]                                          # (tm, D), native dtype
    # transform: Linear(dims, dims) + tanh.  MXU matmul, f32 accumulation.
    h = jnp.tanh(
        jnp.dot(x, wt_ref[...], preferred_element_type=jnp.float32)
        + bt_ref[...]                                       # (1, D) f32 broadcast
    )                                                       # (tm, D) f32
    # context_vector: Linear(dims, 1, bias=False) as a VPU multiply + lane
    # (XLU) reduction -- avoids an MXU matmul with a single useful column.
    logits = jnp.sum(h * cv_ref[...], axis=-1, keepdims=True)   # (tm, 1) f32
    w = jax.nn.sigmoid(logits)                              # (tm, 1) f32
    out_ref[...] = (x * w.astype(x.dtype)).astype(out_ref.dtype)
    # Lane-dense store of the per-row weights: broadcast across 128 lanes so
    # the store is an unmasked vst; the wrapper slices lane 0 back out.
    w_ref[...] = jnp.broadcast_to(w, (w.shape[0], _LANES)).astype(w_ref.dtype)


def attention_forward(x, transform_w, transform_b, context_w, *, tm=256):
    """x: (B, S, D). Returns (x * weights, weights) like the PyTorch module.

    transform_w: (D, D)  -- PyTorch Linear weight (out, in)
    transform_b: (D,)
    context_w:   (1, D)  -- PyTorch Linear weight (out=1, in=D)
    """
    B, S, D = x.shape
    N = B * S

    # Effective row tile: as large as requested, but never larger than the
    # (sublane-padded) row count, and always a multiple of 8 sublanes.
    tm_eff = _round_up(min(tm, _round_up(N, 8)), 8)
    n_pad = _round_up(N, tm_eff)
    num_tiles = n_pad // tm_eff

    x2d = x.reshape(N, D)
    if n_pad != N:
        x2d = jnp.pad(x2d, ((0, n_pad - N), (0, 0)))

    wt_t = transform_w.T.astype(x.dtype)            # (D, D): x @ W^T, MXU dtype = x dtype
    bt = transform_b.astype(jnp.float32).reshape(1, D)
    cv = context_w.astype(jnp.float32).reshape(1, D)

    itemsize = x.dtype.itemsize
    # double-buffered tiles: x, out, weight slab, transform weight, bias + cv
    vmem_need = 2 * (
        2 * tm_eff * D * itemsize
        + tm_eff * _LANES * itemsize
        + D * D * itemsize
        + 2 * D * 4
    )
    vmem_limit = int(min(max(int(vmem_need * 1.5) + (2 << 20), 32 * 1024 * 1024),
                         64 * 1024 * 1024))

    cost = pl.CostEstimate(
        flops=2 * n_pad * D * D + 3 * n_pad * D,
        transcendentals=n_pad * D + n_pad,
        bytes_accessed=(2 * n_pad * D * itemsize          # x in, out
                        + D * D * itemsize                # transform weight
                        + n_pad * _LANES * itemsize),     # weight slab
    )

    grid = (num_tiles,)
    out2d, w_slab = pl.pallas_call(
        _attention_kernel,
        out_shape=(
            jax.ShapeDtypeStruct((n_pad, D), x.dtype),
            jax.ShapeDtypeStruct((n_pad, _LANES), x.dtype),
        ),
        grid_spec=pltpu.PrefetchScalarGridSpec(
            num_scalar_prefetch=0,
            grid=grid,
            in_specs=[
                pl.BlockSpec((tm_eff, D), lambda i: (i, 0)),   # x row tile
                pl.BlockSpec((D, D), lambda i: (0, 0)),        # transform weight (transposed)
                pl.BlockSpec((1, D), lambda i: (0, 0)),        # transform bias (f32)
                pl.BlockSpec((1, D), lambda i: (0, 0)),        # context vector row (f32)
            ],
            out_specs=[
                pl.BlockSpec((tm_eff, D), lambda i: (i, 0)),   # x * weights
                pl.BlockSpec((tm_eff, _LANES), lambda i: (i, 0)),  # lane-dense weight slab
            ],
        ),
        compiler_params=pltpu.CompilerParams(
            dimension_semantics=("parallel",),
            vmem_limit_bytes=vmem_limit,
        ),
        cost_estimate=cost,
    )(x2d, wt_t, bt, cv)

    out = out2d[:N].reshape(B, S, D)
    weights = w_slab[:N, :1].reshape(B, S, 1)
    return out, weights


# ----------------------------------------------------------------------------
# Deterministic parameter init matching Attention.reset_parameters (norm=False):
#   xavier_uniform on transform.weight and context_vector.weight, zeros bias.
# ----------------------------------------------------------------------------
def init_params(key, dims):
    k1, k2 = jax.random.split(key)
    bound_t = (6.0 / (dims + dims)) ** 0.5
    transform_w = jax.random.uniform(k1, (dims, dims), jnp.float32,
                                     minval=-bound_t, maxval=bound_t)
    transform_b = jnp.zeros((dims,), jnp.float32)
    bound_c = (6.0 / (dims + 1)) ** 0.5
    context_w = jax.random.uniform(k2, (1, dims), jnp.float32,
                                   minval=-bound_c, maxval=bound_c)
    return transform_w, transform_b, context_w


def _reference(x, transform_w, transform_b, context_w):
    h = jnp.tanh(jnp.einsum("bsd,ed->bse", x, transform_w) + transform_b)
    w = jax.nn.sigmoid(jnp.einsum("bsd,od->bso", h, context_w))
    return x * w, w


if __name__ == "__main__":
    key = jax.random.PRNGKey(0)

    # --- small shape (single tile, no padding) ------------------------------
    B, S, D = 2, 8, 32
    kx, kp, key = jax.random.split(key, 3)
    x = jax.random.normal(kx, (B, S, D), jnp.float32)
    transform_w, transform_b, context_w = init_params(kp, D)

    out, weights = attention_forward(x, transform_w, transform_b, context_w)
    out = jax.block_until_ready(out)
    weights = jax.block_until_ready(weights)

    ref_out, ref_w = _reference(x, transform_w, transform_b, context_w)
    assert out.shape == (B, S, D) and weights.shape == (B, S, 1)
    assert jnp.allclose(out, ref_out, atol=1e-5, rtol=1e-5)
    assert jnp.allclose(weights, ref_w, atol=1e-5, rtol=1e-5)

    # --- larger shape (multi-tile grid + ragged-row padding) -----------------
    B2, S2, D2 = 4, 100, 256
    kx2, kp2 = jax.random.split(key)
    x2 = jax.random.normal(kx2, (B2, S2, D2), jnp.float32)
    tw2, tb2, cw2 = init_params(kp2, D2)

    out2, weights2 = attention_forward(x2, tw2, tb2, cw2)
    out2 = jax.block_until_ready(out2)
    weights2 = jax.block_until_ready(weights2)

    ref_out2, ref_w2 = _reference(x2, tw2, tb2, cw2)
    assert out2.shape == (B2, S2, D2) and weights2.shape == (B2, S2, 1)
    assert jnp.allclose(out2, ref_out2, atol=2e-4, rtol=2e-4)
    assert jnp.allclose(weights2, ref_w2, atol=2e-4, rtol=2e-4)

    # TODO(synk): norm=True branch (L2Constrain + linear rescaling of weights)
    # is not implemented; the module defaults to norm=False.
    print("KERNEL_OK")
</pallas_src>

<mosaic_0001>
module attributes {stable_mosaic.version = 11 : i64} {
  func.func @_attention_kernel(%arg0: i32, %arg1: memref<16x32xf32, #tpu.memory_space<vmem>>, %arg2: memref<32x32xf32, #tpu.memory_space<vmem>>, %arg3: memref<1x32xf32, #tpu.memory_space<vmem>>, %arg4: memref<1x32xf32, #tpu.memory_space<vmem>>, %arg5: memref<16x32xf32, #tpu.memory_space<vmem>>, %arg6: memref<16x128xf32, #tpu.memory_space<vmem>>) attributes {dimension_semantics = [#tpu.dimension_semantics<parallel>], iteration_bounds = array<i64: 1>, scalar_prefetch = 0 : i64, scratch_operands = 0 : i64, tpu.core_type = #tpu.core_type<tc>, window_params = [{transform_indices = @transform_0, window_bounds = array<i64: 16, 32>}, {pipeline_mode = #tpu.pipeline_mode<synchronous>, transform_indices = @transform_1, window_bounds = array<i64: 32, 32>}, {pipeline_mode = #tpu.pipeline_mode<synchronous>, transform_indices = @transform_2, window_bounds = array<i64: 1, 32>}, {pipeline_mode = #tpu.pipeline_mode<synchronous>, transform_indices = @transform_3, window_bounds = array<i64: 1, 32>}, {transform_indices = @transform_4, window_bounds = array<i64: 16, 32>}, {transform_indices = @transform_5, window_bounds = array<i64: 16, 128>}]} {
    %c0 = arith.constant 0 : index
    %c0_0 = arith.constant 0 : index
    %0 = vector.load %arg1[%c0, %c0_0] : memref<16x32xf32, #tpu.memory_space<vmem>>, vector<16x32xf32>
    %c0_1 = arith.constant 0 : index
    %c0_2 = arith.constant 0 : index
    %1 = vector.load %arg2[%c0_1, %c0_2] : memref<32x32xf32, #tpu.memory_space<vmem>>, vector<32x32xf32>
    %cst = arith.constant dense<0.000000e+00> : vector<16x32xf32>
    %2 = tpu.matmul %0, %1, %cst {dimension_numbers = #tpu.dot_dimension_numbers<[1], [0], [0], [1], [0, 0, 1, 1], [], []>} : vector<16x32xf32>, vector<32x32xf32>, vector<16x32xf32> -> vector<16x32xf32>
    %c0_3 = arith.constant 0 : index
    %c0_4 = arith.constant 0 : index
    %3 = vector.load %arg3[%c0_3, %c0_4] : memref<1x32xf32, #tpu.memory_space<vmem>>, vector<1x32xf32>
    %4 = vector.broadcast %3 : vector<1x32xf32> to vector<16x32xf32>
    %5 = arith.addf %2, %4 : vector<16x32xf32>
    %6 = math.tanh %5 : vector<16x32xf32>
    %c0_5 = arith.constant 0 : index
    %c0_6 = arith.constant 0 : index
    %7 = vector.load %arg4[%c0_5, %c0_6] : memref<1x32xf32, #tpu.memory_space<vmem>>, vector<1x32xf32>
    %8 = vector.broadcast %7 : vector<1x32xf32> to vector<16x32xf32>
    %9 = arith.mulf %6, %8 : vector<16x32xf32>
    %cst_7 = arith.constant dense<0.000000e+00> : vector<16xf32>
    %10 = vector.multi_reduction <add>, %9, %cst_7 [1] : vector<16x32xf32> to vector<16xf32>
    %11 = vector.shape_cast %10 : vector<16xf32> to vector<16x1xf32>
    %12 = arith.negf %11 : vector<16x1xf32>
    %13 = math.exp %12 : vector<16x1xf32>
    %cst_8 = arith.constant 1.000000e+00 : f32
    %14 = vector.broadcast %cst_8 : f32 to vector<16x1xf32>
    %15 = arith.addf %14, %13 : vector<16x1xf32>
    %16 = arith.divf %14, %15 : vector<16x1xf32>
    %17 = vector.broadcast %16 : vector<16x1xf32> to vector<16x32xf32>
    %18 = arith.mulf %0, %17 : vector<16x32xf32>
    %c0_9 = arith.constant 0 : index
    %c0_10 = arith.constant 0 : index
    %19 = vector.load %arg5[%c0_9, %c0_10] : memref<16x32xf32, #tpu.memory_space<vmem>>, vector<16x32xf32>
    tpu.vector_store %arg5[%c0_9, %c0_10], %18 {strides = array<i32>} : memref<16x32xf32, #tpu.memory_space<vmem>>, vector<16x32xf32>,
    %20 = vector.shape_cast %16 : vector<16x1xf32> to vector<16x1xf32>
    %21 = vector.broadcast %20 : vector<16x1xf32> to vector<16x128xf32>
    %c0_11 = arith.constant 0 : index
    %c0_12 = arith.constant 0 : index
    %22 = vector.load %arg6[%c0_11, %c0_12] : memref<16x128xf32, #tpu.memory_space<vmem>>, vector<16x128xf32>
    tpu.vector_store %arg6[%c0_11, %c0_12], %21 {strides = array<i32>} : memref<16x128xf32, #tpu.memory_space<vmem>>, vector<16x128xf32>,
    return
  }
  func.func @transform_0(%arg0: i32) -> (i32, i32) {
    %c0_i32 = arith.constant 0 : i32
    %c0_i32_0 = arith.constant 0 : i32
    return %arg0, %c0_i32 : i32, i32
  }
  func.func @transform_1(%arg0: i32) -> (i32, i32) {
    %c0_i32 = arith.constant 0 : i32
    %c0_i32_0 = arith.constant 0 : i32
    %c0_i32_1 = arith.constant 0 : i32
    return %c0_i32, %c0_i32_0 : i32, i32
  }
  func.func @transform_2(%arg0: i32) -> (i32, i32) {
    %c0_i32 = arith.constant 0 : i32
    %c0_i32_0 = arith.constant 0 : i32
    %c0_i32_1 = arith.constant 0 : i32
    return %c0_i32, %c0_i32_0 : i32, i32
  }
  func.func @transform_3(%arg0: i32) -> (i32, i32) {
    %c0_i32 = arith.constant 0 : i32
    %c0_i32_0 = arith.constant 0 : i32
    %c0_i32_1 = arith.constant 0 : i32
    return %c0_i32, %c0_i32_0 : i32, i32
  }
  func.func @transform_4(%arg0: i32) -> (i32, i32) {
    %c0_i32 = arith.constant 0 : i32
    %c0_i32_0 = arith.constant 0 : i32
    return %arg0, %c0_i32 : i32, i32
  }
  func.func @transform_5(%arg0: i32) -> (i32, i32) {
    %c0_i32 = arith.constant 0 : i32
    %c0_i32_0 = arith.constant 0 : i32
    return %arg0, %c0_i32 : i32, i32
  }
}

</mosaic_0001>

<llo_original>
// kernel: tpu_custom_call.1
$region0: #{tpu_custom_call.1}
  #allocation0 [shape = 'u32[]', space=smem, size = 0x4, offset = 0x4, fixed_abs, tag = 'smem constant byte address 0x4 - core index']
  #allocation1 [shape = 'u32[144,128]{1,0:T(1,128)}', space=vmem, size = 0x12000, scoped, tag = 'internal scratch']
  %s0 = inlined_call_operand.hbm [shape: f32[16,32], index: 0, kind: input, shape index: {}]
  %s1 = inlined_call_operand.hbm [shape: f32[32,32], index: 1, kind: input, shape index: {}]
  %s2 = inlined_call_operand.vmem [shape: f32[1,32], index: 2, kind: input, shape index: {}]
  %s3 = inlined_call_operand.vmem [shape: f32[1,32], index: 3, kind: input, shape index: {}]
  %s4 = inlined_call_operand.hbm [shape: f32[16,32], index: 4, kind: output, shape index: {0}]
  %s5 = inlined_call_operand.hbm [shape: f32[16,128], index: 5, kind: output, shape index: {1}]
  %6 = xla_tuple %s4, %s5
  %s7 = sld [smem:[#allocation0]]
  $region42: #{tpu_custom_call.1} parent=0
    _
  %s9 = ssub.s32 1, %s7
  %s10 = scalar_select 0, %s9, %s7
  $region1: #{tpu_custom_call.1} parent=0
    #allocation2 [shape = 'u8[8192]{0}', space=vmem, size = 0x2000, scoped, tag = 'input window, operand 0, single buffered']
    #allocation3 [shape = 's32[1]{0}', space=sflag, size = 0x4, scoped, tag = 'scoped memory for tpu_custom_call.1']
    #allocation4 [shape = 's32[1]{0}', space=sflag, size = 0x4, scoped, tag = 'scoped memory for tpu_custom_call.1']
    #allocation5 [shape = 'u8[16384]{0}', space=vmem, size = 0x4000, scoped, tag = 'input window, operand 1, single buffered']
    #allocation6 [shape = 's32[1]{0}', space=sflag, size = 0x4, scoped, tag = 'scoped memory for tpu_custom_call.1']
    #allocation7 [shape = 'u8[8192]{0}', space=vmem, size = 0x2000, scoped, tag = 'output window, operand 0, single buffered']
    #allocation8 [shape = 'u8[8192]{0}', space=vmem, size = 0x2000, scoped, tag = 'output window, operand 1, single buffered']
    #allocation9 [shape = 's32[1]{0}', space=sflag, size = 0x4, scoped, tag = 'scoped memory for tpu_custom_call.1']
    %11 = vsyncpa [#allocation3], 0
    %12 = vsyncpa [#allocation6], 0
    %13 = vsyncpa [#allocation4], 0
    %14 = vsyncpa [#allocation9], 0
    // Predicated region
    $region2: #{tpu_custom_call.1} parent=1 // pred_check
      _
    $region3: #{tpu_custom_call.1} parent=1 // pred_check_branch
      %16 = sbr.rel (0) target = $region5
    $region4: #{tpu_custom_call.1} parent=1 // pred_region
      %s18 = ssub.s32 256, 256
      %19 = vsyncadd [#allocation3], %s18
      %s20 = sshll.u32 [#allocation2], 4
      %s21 = int_to_ptr.vmem [resolvable:$true] %s20
      %26 = dma.hbm_to_vmem [thread:$0]  %s0, 256, %s21, [#allocation3], 128, 128, 8
    $region5: #{tpu_custom_call.1} parent=1 // pred_fallthru
      _
    // Predicated region
    $region6: #{tpu_custom_call.1} parent=1 // pred_check
      _
    $region7: #{tpu_custom_call.1} parent=1 // pred_check_branch
      %28 = sbr.rel (0) target = $region9
    $region8: #{tpu_custom_call.1} parent=1 // pred_region
      %s30 = ssub.s32 512, 512
      %31 = vsyncadd [#allocation6], %s30
      %s32 = sshll.u32 [#allocation5], 4
      %s33 = int_to_ptr.vmem [resolvable:$true] %s32
      %38 = dma.hbm_to_vmem [thread:$0]  %s1, 512, %s33, [#allocation6], 128, 128, 8
    $region9: #{tpu_custom_call.1} parent=1 // pred_fallthru
      _
    // Predicated region
    $region10: #{tpu_custom_call.1} parent=1 // pred_check
      _
    $region11: #{tpu_custom_call.1} parent=1 // pred_check_branch
      %40 = sbr.rel (0) target = $region13
    $region12: #{tpu_custom_call.1} parent=1 // pred_region
      _
    $region13: #{tpu_custom_call.1} parent=1 // pred_fallthru
      _
    // Predicated region
    $region14: #{tpu_custom_call.1} parent=1 // pred_check
      _
    $region15: #{tpu_custom_call.1} parent=1 // pred_check_branch
      %42 = sbr.rel (0) target = $region17
    $region16: #{tpu_custom_call.1} parent=1 // pred_region
      _
    $region17: #{tpu_custom_call.1} parent=1 // pred_fallthru
      _
    // Predicated region
    $region18: #{tpu_custom_call.1} parent=1 // pred_check
      _
    $region19: #{tpu_custom_call.1} parent=1 // pred_check_branch
      %44 = sbr.rel (0) target = $region21
    $region20: #{tpu_custom_call.1} parent=1 // pred_region
      %45 = dma.done [#allocation3], 256
    $region21: #{tpu_custom_call.1} parent=1 // pred_fallthru
      _
    // Predicated region
    $region22: #{tpu_custom_call.1} parent=1 // pred_check
      _
    $region23: #{tpu_custom_call.1} parent=1 // pred_check_branch
      %47 = sbr.rel (0) target = $region25
    $region24: #{tpu_custom_call.1} parent=1 // pred_region
      %48 = dma.done [#allocation6], 512
    $region25: #{tpu_custom_call.1} parent=1 // pred_fallthru
      _
    %v49 = vld [vmem:[#allocation2] sm:$0xff]
    %v50 = vld [vmem:[#allocation2 + $0x8] sm:$0xff]
    %v51 = vld [vmem:[#allocation5] sm:$0xff]
    %v52 = vld [vmem:[#allocation5 + $0x8] sm:$0xff]
    %v53 = vld [vmem:[#allocation5 + $0x10] sm:$0xff]
    %v54 = vld [vmem:[#allocation5 + $0x18] sm:$0xff]
    %v55 = vld [vmem:[%s2] sm:$0x1]
    %v57 = vlaneseq
    %v58 = vshrl.u32 %v57, 7
    %v59 = vsub.s32 0, %v58
    %v60 = vrot.slane %v55, %v59
    %vm62 = vcmask 261120
    %v64 = vsel %vm62, %v49, 0
    %v67 = vsel %vm62, %v50, 0
    %69 = vmatprep.subr.mxu0 0.0
    %70 = vmatpush1.msra.mxu0 %v51
    %71 = vmatprep.subr.mxu0 0.0
    %72 = vmatpush1.msra.mxu0 %v52
    %73 = vmatprep.subr.mxu0 0.0
    %74 = vmatpush1.msra.mxu0 %v53
    %75 = vmatprep.subr.mxu0 0.0
    %76 = vmatpush1.msra.mxu0 %v54
    %77 = vmatprep.subr.mxu0 0.0
    %78 = vmatpush1.msra.mxu0 0.0
    %79 = vmatprep.subr.mxu0 0.0
    %80 = vmatpush1.msra.mxu0 0.0
    %81 = vmatprep.subr.mxu0 0.0
    %82 = vmatpush1.msra.mxu0 0.0
    %83 = vmatprep.subr.mxu0 0.0
    %84 = vmatpush1.msra.mxu0 0.0
    %85 = vmatprep.subr.mxu0 0.0
    %86 = vmatpush1.msra.mxu0 0.0
    %87 = vmatprep.subr.mxu0 0.0
    %88 = vmatpush1.msra.mxu0 0.0
    %89 = vmatprep.subr.mxu0 0.0
    %90 = vmatpush1.msra.mxu0 0.0
    %91 = vmatprep.subr.mxu0 0.0
    %92 = vmatpush1.msra.mxu0 0.0
    %93 = vmatprep.subr.mxu0 0.0
    %94 = vmatpush1.msra.mxu0 0.0
    %95 = vmatprep.subr.mxu0 0.0
    %96 = vmatpush1.msra.mxu0 0.0
    %97 = vmatprep.subr.mxu0 0.0
    %98 = vmatpush1.msra.mxu0 0.0
    %99 = vmatprep.subr.mxu0 0.0
    %100 = vmatpush1.msra.mxu0 0.0
    %101 = vmatprep.subr.mxu0 0.0
    %102 = vmatpush1.msra.mxu0 0.0
    %103 = vmatprep.subr.mxu0 0.0
    %104 = vmatpush1.msra.mxu0 0.0
    %105 = vmatprep.subr.mxu0 0.0
    %106 = vmatpush1.msra.mxu0 0.0
    %107 = vmatprep.subr.mxu0 0.0
    %108 = vmatpush1.msra.mxu0 0.0
    %109 = vmatprep.subr.mxu0 0.0
    %110 = vmatpush1.msra.mxu0 0.0
    %111 = vmatprep.subr.mxu0 0.0
    %112 = vmatpush1.msra.mxu0 0.0
    %113 = vmatprep.subr.mxu0 0.0
    %114 = vmatpush1.msra.mxu0 0.0
    %115 = vmatprep.subr.mxu0 0.0
    %116 = vmatpush1.msra.mxu0 0.0
    %117 = vmatprep.subr.mxu0 0.0
    %118 = vmatpush1.msra.mxu0 0.0
    %119 = vmatprep.subr.mxu0 0.0
    %120 = vmatpush1.msra.mxu0 0.0
    %121 = vmatprep.subr.mxu0 0.0
    %122 = vmatpush1.msra.mxu0 0.0
    %123 = vmatprep.subr.mxu0 0.0
    %124 = vmatpush1.msra.mxu0 0.0
    %125 = vmatprep.subr.mxu0 0.0
    %126 = vmatpush1.msra.mxu0 0.0
    %127 = vmatprep.subr.mxu0 0.0
    %128 = vmatpush1.msra.mxu0 0.0
    %129 = vmatprep.subr.mxu0 0.0
    %130 = vmatpush1.msra.mxu0 0.0
    %131 = vmatprep.subr.mxu0 0.0
    %132 = vmatpush1.msra.mxu0 0.0
    %133 = vmatprep.mubr.f32.mxu0 0.0
    %134 = vmatmul.mubr.f32.gmra.mrb[0].mxu0 %v64
    %v135 = vpop.f32.mrb[0].mxu0
    %v136 = vadd.f32 %v60, %v135
    %v137 = vpop.f32.mrb[0].mxu0
    %138 = vmatprep.mubr.f32.mxu0 0.0
    %139 = vmatmul.mubr.f32.gmra.mrb[0].mxu0 %v67
    %v140 = vpop.f32.mrb[0].mxu0
    %v141 = vadd.f32 %v60, %v140
    %v142 = vpop.f32.mrb[0].mxu0
    %143 = vdwg.mxu0
    %v144 = vtanh.pop %v136
    %v145 = vtanh.pop %v141
    %v146 = vld [vmem:[%s3] sm:$0x1]
    %v148 = vlaneseq
    %v149 = vshrl.u32 %v148, 7
    %v150 = vsub.s32 0, %v149
    %v151 = vrot.slane %v146, %v150
    %v153 = vmul.f32 %v144, %v151
    %v154 = vmul.f32 %v145, %v151
    %v155 = vsel %vm62, %v153, 0.0
    %156 = vadd.xlane.f32.xlu0 %v155
    %v157 = vpop.xlane.xlu0 %156
    %v158 = vsel %vm62, %v154, 0.0
    %159 = vadd.xlane.f32.xlu0 %v158
    %v160 = vpop.xlane.xlu0 %159
    %v161 = vxor.u32 %v157, 2147483648
    %v162 = vxor.u32 %v160, 2147483648
    %v163 = vmul.f32 %v161, 1.442695
    %v164 = vpow.pop %v163
    %v165 = vmul.f32 %v162, 1.442695
    %v166 = vpow.pop %v165
    %v167 = vadd.f32 %v164, 1.0
    %v168 = vadd.f32 %v166, 1.0
    %v169 = vrcp.pop %v167
    %v170 = vmul.f32 1.0, %v169
    %v171 = vrcp.pop %v168
    %v172 = vmul.f32 1.0, %v171
    %v173 = vmul.f32 %v49, %v170
    %v174 = vmul.f32 %v50, %v172
    %175 = vst.msk [vmem:[#allocation7] sm:$0xff] %vm62, %v173
    %176 = vst.msk [vmem:[#allocation7 + $0x8] sm:$0xff] %vm62, %v174
    %177 = vst [vmem:[#allocation8] sm:$0xff] %v170
    %178 = vst [vmem:[#allocation8 + $0x8] sm:$0xff] %v172
    // Predicated region
    $region26: #{tpu_custom_call.1} parent=1 // pred_check
      _
    $region27: #{tpu_custom_call.1} parent=1 // pred_check_branch
      %180 = sbr.rel (0) target = $region29
    $region28: #{tpu_custom_call.1} parent=1 // pred_region
      %s182 = ssub.s32 256, 256
      %183 = vsyncadd [#allocation4], %s182
      %s184 = sshll.u32 [#allocation7], 4
      %s185 = int_to_ptr.vmem [resolvable:$true] %s184
      %190 = dma.vmem_to_hbm [thread:$0]  %s185, 256, %s4, [#allocation4], 128, 128, 8
    $region29: #{tpu_custom_call.1} parent=1 // pred_fallthru
      _
    // Predicated region
    $region30: #{tpu_custom_call.1} parent=1 // pred_check
      _
    $region31: #{tpu_custom_call.1} parent=1 // pred_check_branch
      %192 = sbr.rel (0) target = $region33
    $region32: #{tpu_custom_call.1} parent=1 // pred_region
      %s194 = ssub.s32 256, 256
      %195 = vsyncadd [#allocation9], %s194
      %s196 = sshll.u32 [#allocation8], 4
      %s197 = int_to_ptr.vmem [resolvable:$true] %s196
      %202 = dma.vmem_to_hbm [thread:$0]  %s197, 256, %s5, [#allocation9], 128, 128, 8
    $region33: #{tpu_custom_call.1} parent=1 // pred_fallthru
      _
    // Predicated region
    $region34: #{tpu_custom_call.1} parent=1 // pred_check
      _
    $region35: #{tpu_custom_call.1} parent=1 // pred_check_branch
      %204 = sbr.rel (0) target = $region37
    $region36: #{tpu_custom_call.1} parent=1 // pred_region
      %205 = dma.done [#allocation4], 256
    $region37: #{tpu_custom_call.1} parent=1 // pred_fallthru
      _
    // Predicated region
    $region38: #{tpu_custom_call.1} parent=1 // pred_check
      _
    $region39: #{tpu_custom_call.1} parent=1 // pred_check_branch
      %207 = sbr.rel (0) target = $region41
    $region40: #{tpu_custom_call.1} parent=1 // pred_region
      %208 = dma.done [#allocation9], 256
    $region41: #{tpu_custom_call.1} parent=1 // pred_fallthru
      _
    %209 = vsyncpa [#allocation3], 1
    %210 = vsyncpa [#allocation6], 1
    %211 = vsyncpa [#allocation4], 1
    %212 = vsyncpa [#allocation9], 1

</llo_original>
